<compile_context>
chip_gen: v5e
topology: v5e:2x2
jax: 0.10.0
libtpu: 0.0.40
codegen_flags: <defaults>
</compile_context>

<pallas_src>
import functools

import jax
import jax.numpy as jnp
from jax.experimental import pallas as pl
from jax.experimental.pallas import tpu as pltpu


def _round_up(n, m):
    return ((n + m - 1) // m) * m


def _dense_decoder_kernel(x_ref, w1_ref, b1_ref, w2_ref, b2_ref,
                          w3_ref, b3_ref, o_ref):
    """Fused 3-linear MLP forward for one batch tile, fully resident in VMEM.

    Matmuls run on the MXU (compute-dtype inputs, f32 accumulation); bias-add
    and ReLU run on the VPU in f32.  Dropout is identity (eval mode).
    """
    cdt = w1_ref.dtype  # matmul-input ("compute") dtype, e.g. bfloat16

    x = x_ref[...]  # already cast + padded to compute dtype in the wrapper

    # Layer 1: Linear(input -> hidden) + ReLU   (Dropout == identity)
    h = jnp.dot(x, w1_ref[...], preferred_element_type=jnp.float32)
    h = jnp.maximum(h + b1_ref[...], 0.0)

    # Layer 2: Linear(hidden -> hidden) + ReLU  (Dropout == identity)
    h = jnp.dot(h.astype(cdt), w2_ref[...], preferred_element_type=jnp.float32)
    h = jnp.maximum(h + b2_ref[...], 0.0)

    # Output layer: Linear(hidden -> output), no activation.
    y = jnp.dot(h.astype(cdt), w3_ref[...], preferred_element_type=jnp.float32)
    o_ref[...] = (y + b3_ref[...]).astype(o_ref.dtype)


@functools.partial(
    jax.jit,
    static_argnames=("block_b", "compute_dtype", "out_dtype", "weight_buffers"))
def _dense_decoder_impl(x, w1, b1, w2, b2, w3, b3, *, block_b, compute_dtype,
                        out_dtype, weight_buffers):
    B, F_in = x.shape
    H = w1.shape[1]
    F_out = w3.shape[1]
    assert w1.shape == (F_in, H)
    assert w2.shape == (H, H)
    assert w3.shape == (H, F_out)

    # Accept PyTorch-style 1-D biases.
    b1 = b1.reshape(1, H)
    b2 = b2.reshape(1, H)
    b3 = b3.reshape(1, F_out)

    cdt = jnp.dtype(compute_dtype)
    odt = jnp.dtype(out_dtype)
    f32 = jnp.float32

    # --- Padding (all feature dims lane-dense, batch tiled) ------------------
    B_p = _round_up(B, block_b)
    F_in_p = _round_up(F_in, 128)   # lane-dense x loads + full MXU K pass
    H_p = _round_up(H, 128)
    O_p = _round_up(F_out, 128)

    x_p = jnp.pad(x, ((0, B_p - B), (0, F_in_p - F_in))).astype(cdt)
    w1_p = jnp.pad(w1, ((0, F_in_p - F_in), (0, H_p - H))).astype(cdt)
    b1_p = jnp.pad(b1, ((0, 0), (0, H_p - H))).astype(f32)
    w2_p = jnp.pad(w2, ((0, H_p - H), (0, H_p - H))).astype(cdt)
    b2_p = jnp.pad(b2, ((0, 0), (0, H_p - H))).astype(f32)
    w3_p = jnp.pad(w3, ((0, H_p - H), (0, O_p - F_out))).astype(cdt)
    b3_p = jnp.pad(b3, ((0, 0), (0, O_p - F_out))).astype(f32)

    grid = (B_p // block_b,)

    # Weights/biases: constant index_map -> DMA'd into VMEM once and revisited
    # every grid step.  weight_buffers == 1 additionally drops the second
    # (useless) pipeline buffer -- the biggest VMEM saver, most important on
    # v7x's 64 MiB parts.
    wmode = None if weight_buffers == 2 else pl.Buffered(buffer_count=weight_buffers)

    def _const(shape):
        if wmode is None:
            return pl.BlockSpec(shape, lambda i: (0, 0))
        return pl.BlockSpec(shape, lambda i: (0, 0), pipeline_mode=wmode)

    in_specs = [
        pl.BlockSpec((block_b, F_in_p), lambda i: (i, 0)),   # x (batch-tiled)
        _const((F_in_p, H_p)),                               # w1
        _const((1, H_p)),                                    # b1
        _const((H_p, H_p)),                                  # w2
        _const((1, H_p)),                                    # b2
        _const((H_p, O_p)),                                  # w3
        _const((1, O_p)),                                    # b3
    ]
    out_specs = pl.BlockSpec((block_b, O_p), lambda i: (i, 0))

    # --- VMEM budget ----------------------------------------------------------
    weight_bytes = (w1_p.size + w2_p.size + w3_p.size) * cdt.itemsize
    bias_bytes = (b1_p.size + b2_p.size + b3_p.size) * 4
    stream_bytes = 2 * block_b * (F_in_p * cdt.itemsize + O_p * odt.itemsize)
    act_bytes = 2 * block_b * H_p * 4            # f32 intermediates headroom
    vmem_needed = weight_buffers * (weight_bytes + bias_bytes) + stream_bytes + act_bytes
    if vmem_needed > 44 * 1024 * 1024:
        # TODO(synk): K-tile w2/w3 (reduction grid axis + f32 accumulator, or
        # pltpu.emit_pipeline) so huge hidden sizes fit v7x's 64 MiB VMEM.
        raise ValueError(
            "hidden size too large for fully-resident weights "
            f"({vmem_needed} VMEM bytes needed); a K-tiled variant is required")
    # 2x headroom for Mosaic internal scratch / spills, capped so the request is
    # valid on 64 MiB (v7x) as well as 128 MiB (v5e/v6e) parts.
    vmem_limit = int(min(48 * 1024 * 1024,
                         max(2 * vmem_needed, 16 * 1024 * 1024)))

    flops = 2 * B_p * (F_in_p * H_p + H_p * H_p + H_p * O_p)
    bytes_accessed = (
        x_p.size * cdt.itemsize + weight_bytes + bias_bytes
        + B_p * O_p * odt.itemsize)

    out_p = pl.pallas_call(
        _dense_decoder_kernel,
        out_shape=jax.ShapeDtypeStruct((B_p, O_p), odt),
        grid_spec=pltpu.PrefetchScalarGridSpec(
            num_scalar_prefetch=0,
            grid=grid,
            in_specs=in_specs,
            out_specs=out_specs,
        ),
        compiler_params=pltpu.CompilerParams(
            dimension_semantics=("parallel",),
            vmem_limit_bytes=vmem_limit,
        ),
        cost_estimate=pl.CostEstimate(
            flops=flops, transcendentals=0, bytes_accessed=bytes_accessed),
    )(x_p, w1_p, b1_p, w2_p, b2_p, w3_p, b3_p)

    # Strip batch / lane padding.
    return out_p[:B, :F_out]


def dense_decoder(x, w1, b1, w2, b2, w3, b3, *, block_b=None,
                  compute_dtype=jnp.bfloat16, out_dtype=None):
    """y = relu(x@w1+b1); y = relu(y@w2+b2); return y@w3+b3  (DenseDecoder, eval).

    Weights are (in_features, out_features) == torch_linear.weight.T; biases may
    be (N,) (PyTorch layout) or (1, N).  `compute_dtype` is the MXU input dtype
    (bf16 default, f32 for exact torch parity); `out_dtype` defaults to x.dtype
    (pass bf16 to halve the padded-output HBM writeback when F_out << 128).
    """
    B = x.shape[0]
    cdt = jnp.dtype(compute_dtype)
    odt = jnp.dtype(out_dtype) if out_dtype is not None else jnp.dtype(x.dtype)

    # Sublane packing of the narrower of the compute / output dtypes:
    # 8 rows for 32-bit, 16 for bf16, 32 for int8/fp8.
    pack = 8 * (4 // min(cdt.itemsize, odt.itemsize))

    if block_b is None:
        # Aim for >= 4 grid steps at large B (keeps the x/out DMA pipeline warm
        # and lets v7x's two TensorCores split the "parallel" batch axis) while
        # never dropping below one sublane-packed tile and capping at 512 rows
        # (fills v5e/v6e MXU M passes, bounded VMEM).
        block_b = max(pack, min(512, _round_up(pl.cdiv(B, 4), pack)))
    elif block_b <= 0 or block_b % pack != 0:
        raise ValueError(
            f"block_b={block_b} must be a positive multiple of {pack} for "
            f"compute_dtype={cdt.name} / out_dtype={odt.name}")

    try:
        # Preferred path: weights/biases single-buffered in VMEM.
        return _dense_decoder_impl(
            x, w1, b1, w2, b2, w3, b3, block_b=block_b, compute_dtype=cdt,
            out_dtype=odt, weight_buffers=1)
    except ValueError:
        raise
    except Exception:
        # Fallback for jax versions where pipeline_mode=pl.Buffered(1) is not
        # supported by the Mosaic pipeline: default (double) buffering.
        return _dense_decoder_impl(
            x, w1, b1, w2, b2, w3, b3, block_b=block_b, compute_dtype=cdt,
            out_dtype=odt, weight_buffers=2)


def _reference(x, w1, b1, w2, b2, w3, b3):
    h = jnp.maximum(x @ w1 + b1.reshape(1, -1), 0.0)
    h = jnp.maximum(h @ w2 + b2.reshape(1, -1), 0.0)
    return h @ w3 + b3.reshape(1, -1)


if __name__ == "__main__":
    # config = {input_size: 32, hidden_size: 64, output_size: 16,
    #           num_layers: 2, dropout: 0.1 (identity in eval)}
    B, input_size, hidden_size, output_size = 16, 32, 64, 16

    key = jax.random.PRNGKey(0)
    kx, k1, k2, k3, k4, k5, k6 = jax.random.split(key, 7)

    x = jax.random.normal(kx, (B, input_size), dtype=jnp.float32)

    # Weights are (in_features, out_features) == torch weight.T; biases are 1-D
    # exactly like PyTorch stores them.
    w1 = jax.random.normal(k1, (input_size, hidden_size), jnp.float32) * 0.1
    b1 = jax.random.normal(k2, (hidden_size,), jnp.float32) * 0.1
    w2 = jax.random.normal(k3, (hidden_size, hidden_size), jnp.float32) * 0.1
    b2 = jax.random.normal(k4, (hidden_size,), jnp.float32) * 0.1
    w3 = jax.random.normal(k5, (hidden_size, output_size), jnp.float32) * 0.1
    b3 = jax.random.normal(k6, (output_size,), jnp.float32) * 0.1

    ref = _reference(x, w1, b1, w2, b2, w3, b3)

    # Default bf16 MXU path (f32 accumulation): loosened tolerance, well within
    # bf16 input rounding for a 3-layer MLP at this scale.
    out_bf16 = jax.block_until_ready(dense_decoder(x, w1, b1, w2, b2, w3, b3))
    assert out_bf16.shape == (B, output_size)
    assert out_bf16.dtype == x.dtype
    assert jnp.allclose(out_bf16, ref, atol=3e-2, rtol=3e-2), (
        float(jnp.max(jnp.abs(out_bf16 - ref))))

    # f32 path matches the reference tightly.
    out_f32 = jax.block_until_ready(
        dense_decoder(x, w1, b1, w2, b2, w3, b3, compute_dtype=jnp.float32))
    assert out_f32.shape == (B, output_size)
    assert jnp.allclose(out_f32, ref, atol=1e-4, rtol=1e-4), (
        float(jnp.max(jnp.abs(out_f32 - ref))))

    # Narrow-writeback option (bf16 output slab): halves padded-output HBM bytes.
    out_narrow = jax.block_until_ready(
        dense_decoder(x, w1, b1, w2, b2, w3, b3, out_dtype=jnp.bfloat16))
    assert out_narrow.shape == (B, output_size)
    assert out_narrow.dtype == jnp.bfloat16
    assert jnp.allclose(out_narrow.astype(jnp.float32), ref, atol=5e-2, rtol=5e-2), (
        float(jnp.max(jnp.abs(out_narrow.astype(jnp.float32) - ref))))

    print("KERNEL_OK")
</pallas_src>

<mosaic_0001>
module attributes {stable_mosaic.version = 11 : i64} {
  func.func @_dense_decoder_kernel(%arg0: i32, %arg1: memref<16x128xbf16, #tpu.memory_space<vmem>>, %arg2: memref<128x128xbf16, #tpu.memory_space<vmem>>, %arg3: memref<1x128xf32, #tpu.memory_space<vmem>>, %arg4: memref<128x128xbf16, #tpu.memory_space<vmem>>, %arg5: memref<1x128xf32, #tpu.memory_space<vmem>>, %arg6: memref<128x128xbf16, #tpu.memory_space<vmem>>, %arg7: memref<1x128xf32, #tpu.memory_space<vmem>>, %arg8: memref<16x128xf32, #tpu.memory_space<vmem>>) attributes {dimension_semantics = [#tpu.dimension_semantics<parallel>], iteration_bounds = array<i64: 1>, scalar_prefetch = 0 : i64, scratch_operands = 0 : i64, tpu.core_type = #tpu.core_type<tc>, window_params = [{transform_indices = @transform_0, window_bounds = array<i64: 16, 128>}, {pipeline_mode = #tpu.pipeline_mode<synchronous>, transform_indices = @transform_1, window_bounds = array<i64: 128, 128>}, {pipeline_mode = #tpu.pipeline_mode<synchronous>, transform_indices = @transform_2, window_bounds = array<i64: 1, 128>}, {pipeline_mode = #tpu.pipeline_mode<synchronous>, transform_indices = @transform_3, window_bounds = array<i64: 128, 128>}, {pipeline_mode = #tpu.pipeline_mode<synchronous>, transform_indices = @transform_4, window_bounds = array<i64: 1, 128>}, {pipeline_mode = #tpu.pipeline_mode<synchronous>, transform_indices = @transform_5, window_bounds = array<i64: 128, 128>}, {pipeline_mode = #tpu.pipeline_mode<synchronous>, transform_indices = @transform_6, window_bounds = array<i64: 1, 128>}, {transform_indices = @transform_7, window_bounds = array<i64: 16, 128>}]} {
    %c0 = arith.constant 0 : index
    %c0_0 = arith.constant 0 : index
    %0 = vector.load %arg1[%c0, %c0_0] : memref<16x128xbf16, #tpu.memory_space<vmem>>, vector<16x128xbf16>
    %c0_1 = arith.constant 0 : index
    %c0_2 = arith.constant 0 : index
    %1 = vector.load %arg2[%c0_1, %c0_2] : memref<128x128xbf16, #tpu.memory_space<vmem>>, vector<128x128xbf16>
    %cst = arith.constant dense<0.000000e+00> : vector<16x128xf32>
    %2 = tpu.matmul %0, %1, %cst {dimension_numbers = #tpu.dot_dimension_numbers<[1], [0], [0], [1], [0, 0, 1, 1], [], []>} : vector<16x128xbf16>, vector<128x128xbf16>, vector<16x128xf32> -> vector<16x128xf32>
    %c0_3 = arith.constant 0 : index
    %c0_4 = arith.constant 0 : index
    %3 = vector.load %arg3[%c0_3, %c0_4] : memref<1x128xf32, #tpu.memory_space<vmem>>, vector<1x128xf32>
    %4 = vector.broadcast %3 : vector<1x128xf32> to vector<16x128xf32>
    %5 = arith.addf %2, %4 : vector<16x128xf32>
    %cst_5 = arith.constant 0.000000e+00 : f32
    %6 = vector.broadcast %cst_5 : f32 to vector<16x128xf32>
    %7 = arith.maximumf %5, %6 : vector<16x128xf32>
    %8 = arith.truncf %7 : vector<16x128xf32> to vector<16x128xbf16>
    %c0_6 = arith.constant 0 : index
    %c0_7 = arith.constant 0 : index
    %9 = vector.load %arg4[%c0_6, %c0_7] : memref<128x128xbf16, #tpu.memory_space<vmem>>, vector<128x128xbf16>
    %cst_8 = arith.constant dense<0.000000e+00> : vector<16x128xf32>
    %10 = tpu.matmul %8, %9, %cst_8 {dimension_numbers = #tpu.dot_dimension_numbers<[1], [0], [0], [1], [0, 0, 1, 1], [], []>} : vector<16x128xbf16>, vector<128x128xbf16>, vector<16x128xf32> -> vector<16x128xf32>
    %c0_9 = arith.constant 0 : index
    %c0_10 = arith.constant 0 : index
    %11 = vector.load %arg5[%c0_9, %c0_10] : memref<1x128xf32, #tpu.memory_space<vmem>>, vector<1x128xf32>
    %12 = vector.broadcast %11 : vector<1x128xf32> to vector<16x128xf32>
    %13 = arith.addf %10, %12 : vector<16x128xf32>
    %cst_11 = arith.constant 0.000000e+00 : f32
    %14 = vector.broadcast %cst_11 : f32 to vector<16x128xf32>
    %15 = arith.maximumf %13, %14 : vector<16x128xf32>
    %16 = arith.truncf %15 : vector<16x128xf32> to vector<16x128xbf16>
    %c0_12 = arith.constant 0 : index
    %c0_13 = arith.constant 0 : index
    %17 = vector.load %arg6[%c0_12, %c0_13] : memref<128x128xbf16, #tpu.memory_space<vmem>>, vector<128x128xbf16>
    %cst_14 = arith.constant dense<0.000000e+00> : vector<16x128xf32>
    %18 = tpu.matmul %16, %17, %cst_14 {dimension_numbers = #tpu.dot_dimension_numbers<[1], [0], [0], [1], [0, 0, 1, 1], [], []>} : vector<16x128xbf16>, vector<128x128xbf16>, vector<16x128xf32> -> vector<16x128xf32>
    %c0_15 = arith.constant 0 : index
    %c0_16 = arith.constant 0 : index
    %19 = vector.load %arg7[%c0_15, %c0_16] : memref<1x128xf32, #tpu.memory_space<vmem>>, vector<1x128xf32>
    %20 = vector.broadcast %19 : vector<1x128xf32> to vector<16x128xf32>
    %21 = arith.addf %18, %20 : vector<16x128xf32>
    %c0_17 = arith.constant 0 : index
    %c0_18 = arith.constant 0 : index
    %22 = vector.load %arg8[%c0_17, %c0_18] : memref<16x128xf32, #tpu.memory_space<vmem>>, vector<16x128xf32>
    tpu.vector_store %arg8[%c0_17, %c0_18], %21 {strides = array<i32>} : memref<16x128xf32, #tpu.memory_space<vmem>>, vector<16x128xf32>,
    return
  }
  func.func @transform_0(%arg0: i32) -> (i32, i32) {
    %c0_i32 = arith.constant 0 : i32
    %c0_i32_0 = arith.constant 0 : i32
    return %arg0, %c0_i32 : i32, i32
  }
  func.func @transform_1(%arg0: i32) -> (i32, i32) {
    %c0_i32 = arith.constant 0 : i32
    %c0_i32_0 = arith.constant 0 : i32
    %c0_i32_1 = arith.constant 0 : i32
    return %c0_i32, %c0_i32_0 : i32, i32
  }
  func.func @transform_2(%arg0: i32) -> (i32, i32) {
    %c0_i32 = arith.constant 0 : i32
    %c0_i32_0 = arith.constant 0 : i32
    %c0_i32_1 = arith.constant 0 : i32
    return %c0_i32, %c0_i32_0 : i32, i32
  }
  func.func @transform_3(%arg0: i32) -> (i32, i32) {
    %c0_i32 = arith.constant 0 : i32
    %c0_i32_0 = arith.constant 0 : i32
    %c0_i32_1 = arith.constant 0 : i32
    return %c0_i32, %c0_i32_0 : i32, i32
  }
  func.func @transform_4(%arg0: i32) -> (i32, i32) {
    %c0_i32 = arith.constant 0 : i32
    %c0_i32_0 = arith.constant 0 : i32
    %c0_i32_1 = arith.constant 0 : i32
    return %c0_i32, %c0_i32_0 : i32, i32
  }
  func.func @transform_5(%arg0: i32) -> (i32, i32) {
    %c0_i32 = arith.constant 0 : i32
    %c0_i32_0 = arith.constant 0 : i32
    %c0_i32_1 = arith.constant 0 : i32
    return %c0_i32, %c0_i32_0 : i32, i32
  }
  func.func @transform_6(%arg0: i32) -> (i32, i32) {
    %c0_i32 = arith.constant 0 : i32
    %c0_i32_0 = arith.constant 0 : i32
    %c0_i32_1 = arith.constant 0 : i32
    return %c0_i32, %c0_i32_0 : i32, i32
  }
  func.func @transform_7(%arg0: i32) -> (i32, i32) {
    %c0_i32 = arith.constant 0 : i32
    %c0_i32_0 = arith.constant 0 : i32
    return %arg0, %c0_i32 : i32, i32
  }
}

module attributes {stable_mosaic.version = 11 : i64} {
  func.func @_dense_decoder_kernel(%arg0: i32, %arg1: memref<16x128xbf16, #tpu.memory_space<vmem>>, %arg2: memref<128x128xbf16, #tpu.memory_space<vmem>>, %arg3: memref<1x128xf32, #tpu.memory_space<vmem>>, %arg4: memref<128x128xbf16, #tpu.memory_space<vmem>>, %arg5: memref<1x128xf32, #tpu.memory_space<vmem>>, %arg6: memref<128x128xbf16, #tpu.memory_space<vmem>>, %arg7: memref<1x128xf32, #tpu.memory_space<vmem>>, %arg8: memref<16x128xf32, #tpu.memory_space<vmem>>) attributes {dimension_semantics = [#tpu.dimension_semantics<parallel>], iteration_bounds = array<i64: 1>, scalar_prefetch = 0 : i64, scratch_operands = 0 : i64, tpu.core_type = #tpu.core_type<tc>, window_params = [{transform_indices = @transform_0, window_bounds = array<i64: 16, 128>}, {pipeline_mode = #tpu.pipeline_mode<synchronous>, transform_indices = @transform_1, window_bounds = array<i64: 128, 128>}, {pipeline_mode = #tpu.pipeline_mode<synchronous>, transform_indices = @transform_2, window_bounds = array<i64: 1, 128>}, {pipeline_mode = #tpu.pipeline_mode<synchronous>, transform_indices = @transform_3, window_bounds = array<i64: 128, 128>}, {pipeline_mode = #tpu.pipeline_mode<synchronous>, transform_indices = @transform_4, window_bounds = array<i64: 1, 128>}, {pipeline_mode = #tpu.pipeline_mode<synchronous>, transform_indices = @transform_5, window_bounds = array<i64: 128, 128>}, {pipeline_mode = #tpu.pipeline_mode<synchronous>, transform_indices = @transform_6, window_bounds = array<i64: 1, 128>}, {transform_indices = @transform_7, window_bounds = array<i64: 16, 128>}]} {
    %c0 = arith.constant 0 : index
    %c0_0 = arith.constant 0 : index
    %0 = vector.load %arg1[%c0, %c0_0] : memref<16x128xbf16, #tpu.memory_space<vmem>>, vector<16x128xbf16>
    %c0_1 = arith.constant 0 : index
    %c0_2 = arith.constant 0 : index
    %1 = vector.load %arg2[%c0_1, %c0_2] : memref<128x128xbf16, #tpu.memory_space<vmem>>, vector<128x128xbf16>
    %cst = arith.constant dense<0.000000e+00> : vector<16x128xf32>
    %2 = tpu.matmul %0, %1, %cst {dimension_numbers = #tpu.dot_dimension_numbers<[1], [0], [0], [1], [0, 0, 1, 1], [], []>} : vector<16x128xbf16>, vector<128x128xbf16>, vector<16x128xf32> -> vector<16x128xf32>
    %c0_3 = arith.constant 0 : index
    %c0_4 = arith.constant 0 : index
    %3 = vector.load %arg3[%c0_3, %c0_4] : memref<1x128xf32, #tpu.memory_space<vmem>>, vector<1x128xf32>
    %4 = vector.broadcast %3 : vector<1x128xf32> to vector<16x128xf32>
    %5 = arith.addf %2, %4 : vector<16x128xf32>
    %cst_5 = arith.constant 0.000000e+00 : f32
    %6 = vector.broadcast %cst_5 : f32 to vector<16x128xf32>
    %7 = arith.maximumf %5, %6 : vector<16x128xf32>
    %8 = arith.truncf %7 : vector<16x128xf32> to vector<16x128xbf16>
    %c0_6 = arith.constant 0 : index
    %c0_7 = arith.constant 0 : index
    %9 = vector.load %arg4[%c0_6, %c0_7] : memref<128x128xbf16, #tpu.memory_space<vmem>>, vector<128x128xbf16>
    %cst_8 = arith.constant dense<0.000000e+00> : vector<16x128xf32>
    %10 = tpu.matmul %8, %9, %cst_8 {dimension_numbers = #tpu.dot_dimension_numbers<[1], [0], [0], [1], [0, 0, 1, 1], [], []>} : vector<16x128xbf16>, vector<128x128xbf16>, vector<16x128xf32> -> vector<16x128xf32>
    %c0_9 = arith.constant 0 : index
    %c0_10 = arith.constant 0 : index
    %11 = vector.load %arg5[%c0_9, %c0_10] : memref<1x128xf32, #tpu.memory_space<vmem>>, vector<1x128xf32>
    %12 = vector.broadcast %11 : vector<1x128xf32> to vector<16x128xf32>
    %13 = arith.addf %10, %12 : vector<16x128xf32>
    %cst_11 = arith.constant 0.000000e+00 : f32
    %14 = vector.broadcast %cst_11 : f32 to vector<16x128xf32>
    %15 = arith.maximumf %13, %14 : vector<16x128xf32>
    %16 = arith.truncf %15 : vector<16x128xf32> to vector<16x128xbf16>
    %c0_12 = arith.constant 0 : index
    %c0_13 = arith.constant 0 : index
    %17 = vector.load %arg6[%c0_12, %c0_13] : memref<128x128xbf16, #tpu.memory_space<vmem>>, vector<128x128xbf16>
    %cst_14 = arith.constant dense<0.000000e+00> : vector<16x128xf32>
    %18 = tpu.matmul %16, %17, %cst_14 {dimension_numbers = #tpu.dot_dimension_numbers<[1], [0], [0], [1], [0, 0, 1, 1], [], []>} : vector<16x128xbf16>, vector<128x128xbf16>, vector<16x128xf32> -> vector<16x128xf32>
    %c0_15 = arith.constant 0 : index
    %c0_16 = arith.constant 0 : index
    %19 = vector.load %arg7[%c0_15, %c0_16] : memref<1x128xf32, #tpu.memory_space<vmem>>, vector<1x128xf32>
    %20 = vector.broadcast %19 : vector<1x128xf32> to vector<16x128xf32>
    %21 = arith.addf %18, %20 : vector<16x128xf32>
    %c0_17 = arith.constant 0 : index
    %c0_18 = arith.constant 0 : index
    %22 = vector.load %arg8[%c0_17, %c0_18] : memref<16x128xf32, #tpu.memory_space<vmem>>, vector<16x128xf32>
    tpu.vector_store %arg8[%c0_17, %c0_18], %21 {strides = array<i32>} : memref<16x128xf32, #tpu.memory_space<vmem>>, vector<16x128xf32>,
    return
  }
  func.func @transform_0(%arg0: i32) -> (i32, i32) {
    %c0_i32 = arith.constant 0 : i32
    %c0_i32_0 = arith.constant 0 : i32
    return %arg0, %c0_i32 : i32, i32
  }
  func.func @transform_1(%arg0: i32) -> (i32, i32) {
    %c0_i32 = arith.constant 0 : i32
    %c0_i32_0 = arith.constant 0 : i32
    %c0_i32_1 = arith.constant 0 : i32
    return %c0_i32, %c0_i32_0 : i32, i32
  }
  func.func @transform_2(%arg0: i32) -> (i32, i32) {
    %c0_i32 = arith.constant 0 : i32
    %c0_i32_0 = arith.constant 0 : i32
    %c0_i32_1 = arith.constant 0 : i32
    return %c0_i32, %c0_i32_0 : i32, i32
  }
  func.func @transform_3(%arg0: i32) -> (i32, i32) {
    %c0_i32 = arith.constant 0 : i32
    %c0_i32_0 = arith.constant 0 : i32
    %c0_i32_1 = arith.constant 0 : i32
    return %c0_i32, %c0_i32_0 : i32, i32
  }
  func.func @transform_4(%arg0: i32) -> (i32, i32) {
    %c0_i32 = arith.constant 0 : i32
    %c0_i32_0 = arith.constant 0 : i32
    %c0_i32_1 = arith.constant 0 : i32
    return %c0_i32, %c0_i32_0 : i32, i32
  }
  func.func @transform_5(%arg0: i32) -> (i32, i32) {
    %c0_i32 = arith.constant 0 : i32
    %c0_i32_0 = arith.constant 0 : i32
    %c0_i32_1 = arith.constant 0 : i32
    return %c0_i32, %c0_i32_0 : i32, i32
  }
  func.func @transform_6(%arg0: i32) -> (i32, i32) {
    %c0_i32 = arith.constant 0 : i32
    %c0_i32_0 = arith.constant 0 : i32
    %c0_i32_1 = arith.constant 0 : i32
    return %c0_i32, %c0_i32_0 : i32, i32
  }
  func.func @transform_7(%arg0: i32) -> (i32, i32) {
    %c0_i32 = arith.constant 0 : i32
    %c0_i32_0 = arith.constant 0 : i32
    return %arg0, %c0_i32 : i32, i32
  }
}

</mosaic_0001>

<llo_original>
// kernel: _dense_decoder_impl.1
$region0: #{_dense_decoder_impl.1}
  #allocation0 [shape = 'u32[]', space=smem, size = 0x4, offset = 0x4, fixed_abs, tag = 'smem constant byte address 0x4 - core index']
  #allocation1 [shape = 'u32[72,128]{1,0:T(1,128)}', space=vmem, size = 0x9000, scoped, tag = 'internal scratch']
  %s0 = inlined_call_operand.vmem [shape: bf16[16,128], index: 0, kind: input, shape index: {}]
  %s1 = inlined_call_operand.vmem [shape: bf16[128,128], index: 1, kind: input, shape index: {}]
  %s2 = inlined_call_operand.vmem [shape: f32[1,128], index: 2, kind: input, shape index: {}]
  %s3 = inlined_call_operand.vmem [shape: bf16[128,128], index: 3, kind: input, shape index: {}]
  %s4 = inlined_call_operand.vmem [shape: f32[1,128], index: 4, kind: input, shape index: {}]
  %s5 = inlined_call_operand.vmem [shape: bf16[128,128], index: 5, kind: input, shape index: {}]
  %s6 = inlined_call_operand.vmem [shape: f32[1,128], index: 6, kind: input, shape index: {}]
  %s7 = inlined_call_operand.hbm [shape: f32[16,128], index: 7, kind: output, shape index: {}]
  %s8 = sld [smem:[#allocation0]]
  $region38: #{_dense_decoder_impl.1} parent=0
    _
  %s10 = ssub.s32 1, %s8
  %s11 = scalar_select 0, %s10, %s8
  $region1: #{_dense_decoder_impl.1} parent=0
    #allocation2 [shape = 'u8[8192]{0}', space=vmem, size = 0x2000, scoped, tag = 'output window, operand 0, single buffered']
    #allocation3 [shape = 's32[1]{0}', space=sflag, size = 0x4, scoped, tag = 'scoped memory for _dense_decoder_impl.1']
    %12 = vsyncpa [#allocation3], 0
    // Predicated region
    $region2: #{_dense_decoder_impl.1} parent=1 // pred_check
      _
    $region3: #{_dense_decoder_impl.1} parent=1 // pred_check_branch
      %14 = sbr.rel (0) target = $region5
    $region4: #{_dense_decoder_impl.1} parent=1 // pred_region
      _
    $region5: #{_dense_decoder_impl.1} parent=1 // pred_fallthru
      _
    // Predicated region
    $region6: #{_dense_decoder_impl.1} parent=1 // pred_check
      _
    $region7: #{_dense_decoder_impl.1} parent=1 // pred_check_branch
      %16 = sbr.rel (0) target = $region9
    $region8: #{_dense_decoder_impl.1} parent=1 // pred_region
      _
    $region9: #{_dense_decoder_impl.1} parent=1 // pred_fallthru
      _
    // Predicated region
    $region10: #{_dense_decoder_impl.1} parent=1 // pred_check
      _
    $region11: #{_dense_decoder_impl.1} parent=1 // pred_check_branch
      %18 = sbr.rel (0) target = $region13
    $region12: #{_dense_decoder_impl.1} parent=1 // pred_region
      _
    $region13: #{_dense_decoder_impl.1} parent=1 // pred_fallthru
      _
    // Predicated region
    $region14: #{_dense_decoder_impl.1} parent=1 // pred_check
      _
    $region15: #{_dense_decoder_impl.1} parent=1 // pred_check_branch
      %20 = sbr.rel (0) target = $region17
    $region16: #{_dense_decoder_impl.1} parent=1 // pred_region
      _
    $region17: #{_dense_decoder_impl.1} parent=1 // pred_fallthru
      _
    // Predicated region
    $region18: #{_dense_decoder_impl.1} parent=1 // pred_check
      _
    $region19: #{_dense_decoder_impl.1} parent=1 // pred_check_branch
      %22 = sbr.rel (0) target = $region21
    $region20: #{_dense_decoder_impl.1} parent=1 // pred_region
      _
    $region21: #{_dense_decoder_impl.1} parent=1 // pred_fallthru
      _
    // Predicated region
    $region22: #{_dense_decoder_impl.1} parent=1 // pred_check
      _
    $region23: #{_dense_decoder_impl.1} parent=1 // pred_check_branch
      %24 = sbr.rel (0) target = $region25
    $region24: #{_dense_decoder_impl.1} parent=1 // pred_region
      _
    $region25: #{_dense_decoder_impl.1} parent=1 // pred_fallthru
      _
    // Predicated region
    $region26: #{_dense_decoder_impl.1} parent=1 // pred_check
      _
    $region27: #{_dense_decoder_impl.1} parent=1 // pred_check_branch
      %26 = sbr.rel (0) target = $region29
    $region28: #{_dense_decoder_impl.1} parent=1 // pred_region
      _
    $region29: #{_dense_decoder_impl.1} parent=1 // pred_fallthru
      _
    %v27 = vld [vmem:[%s0] sm:$0xf]
    %v28 = vld [vmem:[%s0 + $0x4] sm:$0xf]
    %v29 = vld [vmem:[%s1] sm:$0xf]
    %v30 = vld [vmem:[%s1 + $0x4] sm:$0xf]
    %v31 = vld [vmem:[%s1 + $0x8] sm:$0xf]
    %v32 = vld [vmem:[%s1 + $0xc] sm:$0xf]
    %v33 = vld [vmem:[%s1 + $0x10] sm:$0xf]
    %v34 = vld [vmem:[%s1 + $0x14] sm:$0xf]
    %v35 = vld [vmem:[%s1 + $0x18] sm:$0xf]
    %v36 = vld [vmem:[%s1 + $0x1c] sm:$0xf]
    %v37 = vld [vmem:[%s1 + $0x20] sm:$0xf]
    %v38 = vld [vmem:[%s1 + $0x24] sm:$0xf]
    %v39 = vld [vmem:[%s1 + $0x28] sm:$0xf]
    %v40 = vld [vmem:[%s1 + $0x2c] sm:$0xf]
    %v41 = vld [vmem:[%s1 + $0x30] sm:$0xf]
    %v42 = vld [vmem:[%s1 + $0x34] sm:$0xf]
    %v43 = vld [vmem:[%s1 + $0x38] sm:$0xf]
    %v44 = vld [vmem:[%s1 + $0x3c] sm:$0xf]
    %v45 = vld [vmem:[%s2] sm:$0x1]
    %v47 = vperm.slane %v45, 0
    %v51 = vunpack.c.l.b16 %v27
    %v52 = vunpack.c.l.b16 %v28
    %v53 = vpack.c.b16 %v52, %v51
    %v71 = vunpack.c.l.b16 %v29
    %v72 = vunpack.c.l.b16 %v30
    %v73 = vunpack.c.l.b16 %v31
    %v74 = vunpack.c.l.b16 %v32
    %v75 = vunpack.c.l.b16 %v33
    %v76 = vunpack.c.l.b16 %v34
    %v77 = vunpack.c.l.b16 %v35
    %v78 = vunpack.c.l.b16 %v36
    %v79 = vunpack.c.l.b16 %v37
    %v80 = vunpack.c.l.b16 %v38
    %v81 = vunpack.c.l.b16 %v39
    %v82 = vunpack.c.l.b16 %v40
    %v83 = vunpack.c.l.b16 %v41
    %v84 = vunpack.c.l.b16 %v42
    %v85 = vunpack.c.l.b16 %v43
    %v86 = vunpack.c.l.b16 %v44
    %v87 = vpack.c.b16 %v72, %v71
    %v88 = vpack.c.b16 %v74, %v73
    %v89 = vpack.c.b16 %v76, %v75
    %v90 = vpack.c.b16 %v78, %v77
    %v91 = vpack.c.b16 %v80, %v79
    %v92 = vpack.c.b16 %v82, %v81
    %v93 = vpack.c.b16 %v84, %v83
    %v94 = vpack.c.b16 %v86, %v85
    %103 = vmatpush.bf16.msra.mxu0 %v94
    %104 = vmatpush.bf16.msra.mxu0 %v93
    %105 = vmatpush.bf16.msra.mxu0 %v92
    %106 = vmatpush.bf16.msra.mxu0 %v91
    %107 = vmatpush.bf16.msra.mxu0 %v90
    %108 = vmatpush.bf16.msra.mxu0 %v89
    %109 = vmatpush.bf16.msra.mxu0 %v88
    %110 = vmatpush.bf16.msra.mxu0 %v87
    %111 = vmatmul.bf16.gmra.mxu0 %v53
    %v112 = vpop.f32.mrf.mxu0
    %v113 = vadd.f32 %v47, %v112
    %v114 = vpop.f32.mrf.mxu0
    %v115 = vadd.f32 %v47, %v114
    %116 = vdwg.mxu0
    %v117 = vmax.f32 %v113, 0.0
    %v118 = vmax.f32 %v115, 0.0
    %v119 = vpack.c.bf16 %v118, %v117
    %v120 = vld [vmem:[%s3] sm:$0xf]
    %v121 = vld [vmem:[%s3 + $0x4] sm:$0xf]
    %v122 = vld [vmem:[%s3 + $0x8] sm:$0xf]
    %v123 = vld [vmem:[%s3 + $0xc] sm:$0xf]
    %v124 = vld [vmem:[%s3 + $0x10] sm:$0xf]
    %v125 = vld [vmem:[%s3 + $0x14] sm:$0xf]
    %v126 = vld [vmem:[%s3 + $0x18] sm:$0xf]
    %v127 = vld [vmem:[%s3 + $0x1c] sm:$0xf]
    %v128 = vld [vmem:[%s3 + $0x20] sm:$0xf]
    %v129 = vld [vmem:[%s3 + $0x24] sm:$0xf]
    %v130 = vld [vmem:[%s3 + $0x28] sm:$0xf]
    %v131 = vld [vmem:[%s3 + $0x2c] sm:$0xf]
    %v132 = vld [vmem:[%s3 + $0x30] sm:$0xf]
    %v133 = vld [vmem:[%s3 + $0x34] sm:$0xf]
    %v134 = vld [vmem:[%s3 + $0x38] sm:$0xf]
    %v135 = vld [vmem:[%s3 + $0x3c] sm:$0xf]
    %v136 = vld [vmem:[%s4] sm:$0x1]
    %v138 = vperm.slane %v136, 0
    %v156 = vunpack.c.l.b16 %v120
    %v157 = vunpack.c.l.b16 %v121
    %v158 = vunpack.c.l.b16 %v122
    %v159 = vunpack.c.l.b16 %v123
    %v160 = vunpack.c.l.b16 %v124
    %v161 = vunpack.c.l.b16 %v125
    %v162 = vunpack.c.l.b16 %v126
    %v163 = vunpack.c.l.b16 %v127
    %v164 = vunpack.c.l.b16 %v128
    %v165 = vunpack.c.l.b16 %v129
    %v166 = vunpack.c.l.b16 %v130
    %v167 = vunpack.c.l.b16 %v131
    %v168 = vunpack.c.l.b16 %v132
    %v169 = vunpack.c.l.b16 %v133
    %v170 = vunpack.c.l.b16 %v134
    %v171 = vunpack.c.l.b16 %v135
    %v172 = vpack.c.b16 %v157, %v156
    %v173 = vpack.c.b16 %v159, %v158
    %v174 = vpack.c.b16 %v161, %v160
    %v175 = vpack.c.b16 %v163, %v162
    %v176 = vpack.c.b16 %v165, %v164
    %v177 = vpack.c.b16 %v167, %v166
    %v178 = vpack.c.b16 %v169, %v168
    %v179 = vpack.c.b16 %v171, %v170
    %188 = vmatpush.bf16.msra.mxu0 %v179
    %189 = vmatpush.bf16.msra.mxu0 %v178
    %190 = vmatpush.bf16.msra.mxu0 %v177
    %191 = vmatpush.bf16.msra.mxu0 %v176
    %192 = vmatpush.bf16.msra.mxu0 %v175
    %193 = vmatpush.bf16.msra.mxu0 %v174
    %194 = vmatpush.bf16.msra.mxu0 %v173
    %195 = vmatpush.bf16.msra.mxu0 %v172
    %196 = vmatmul.bf16.gmra.mxu0 %v119
    %v197 = vpop.f32.mrf.mxu0
    %v198 = vadd.f32 %v138, %v197
    %v199 = vpop.f32.mrf.mxu0
    %v200 = vadd.f32 %v138, %v199
    %201 = vdwg.mxu0
    %v202 = vmax.f32 %v198, 0.0
    %v203 = vmax.f32 %v200, 0.0
    %v204 = vpack.c.bf16 %v203, %v202
    %v205 = vld [vmem:[%s5] sm:$0xf]
    %v206 = vld [vmem:[%s5 + $0x4] sm:$0xf]
    %v207 = vld [vmem:[%s5 + $0x8] sm:$0xf]
    %v208 = vld [vmem:[%s5 + $0xc] sm:$0xf]
    %v209 = vld [vmem:[%s5 + $0x10] sm:$0xf]
    %v210 = vld [vmem:[%s5 + $0x14] sm:$0xf]
    %v211 = vld [vmem:[%s5 + $0x18] sm:$0xf]
    %v212 = vld [vmem:[%s5 + $0x1c] sm:$0xf]
    %v213 = vld [vmem:[%s5 + $0x20] sm:$0xf]
    %v214 = vld [vmem:[%s5 + $0x24] sm:$0xf]
    %v215 = vld [vmem:[%s5 + $0x28] sm:$0xf]
    %v216 = vld [vmem:[%s5 + $0x2c] sm:$0xf]
    %v217 = vld [vmem:[%s5 + $0x30] sm:$0xf]
    %v218 = vld [vmem:[%s5 + $0x34] sm:$0xf]
    %v219 = vld [vmem:[%s5 + $0x38] sm:$0xf]
    %v220 = vld [vmem:[%s5 + $0x3c] sm:$0xf]
    %v221 = vld [vmem:[%s6] sm:$0x1]
    %v223 = vperm.slane %v221, 0
    %v241 = vunpack.c.l.b16 %v205
    %v242 = vunpack.c.l.b16 %v206
    %v243 = vunpack.c.l.b16 %v207
    %v244 = vunpack.c.l.b16 %v208
    %v245 = vunpack.c.l.b16 %v209
    %v246 = vunpack.c.l.b16 %v210
    %v247 = vunpack.c.l.b16 %v211
    %v248 = vunpack.c.l.b16 %v212
    %v249 = vunpack.c.l.b16 %v213
    %v250 = vunpack.c.l.b16 %v214
    %v251 = vunpack.c.l.b16 %v215
    %v252 = vunpack.c.l.b16 %v216
    %v253 = vunpack.c.l.b16 %v217
    %v254 = vunpack.c.l.b16 %v218
    %v255 = vunpack.c.l.b16 %v219
    %v256 = vunpack.c.l.b16 %v220
    %v257 = vpack.c.b16 %v242, %v241
    %v258 = vpack.c.b16 %v244, %v243
    %v259 = vpack.c.b16 %v246, %v245
    %v260 = vpack.c.b16 %v248, %v247
    %v261 = vpack.c.b16 %v250, %v249
    %v262 = vpack.c.b16 %v252, %v251
    %v263 = vpack.c.b16 %v254, %v253
    %v264 = vpack.c.b16 %v256, %v255
    %273 = vmatpush.bf16.msra.mxu0 %v264
    %274 = vmatpush.bf16.msra.mxu0 %v263
    %275 = vmatpush.bf16.msra.mxu0 %v262
    %276 = vmatpush.bf16.msra.mxu0 %v261
    %277 = vmatpush.bf16.msra.mxu0 %v260
    %278 = vmatpush.bf16.msra.mxu0 %v259
    %279 = vmatpush.bf16.msra.mxu0 %v258
    %280 = vmatpush.bf16.msra.mxu0 %v257
    %281 = vmatmul.bf16.gmra.mxu0 %v204
    %v282 = vpop.f32.mrf.mxu0
    %v283 = vadd.f32 %v223, %v282
    %v284 = vpop.f32.mrf.mxu0
    %v285 = vadd.f32 %v223, %v284
    %286 = vdwg.mxu0
    %287 = vst [vmem:[#allocation2] sm:$0xff] %v283
    %288 = vst [vmem:[#allocation2 + $0x8] sm:$0xff] %v285
    // Predicated region
    $region30: #{_dense_decoder_impl.1} parent=1 // pred_check
      _
    $region31: #{_dense_decoder_impl.1} parent=1 // pred_check_branch
      %290 = sbr.rel (0) target = $region33
    $region32: #{_dense_decoder_impl.1} parent=1 // pred_region
      %292 = vsyncadd [#allocation3], 0
      %s293 = sshll.u32 [#allocation2], 4
      %s294 = int_to_ptr.vmem [resolvable:$true] %s293
      %s295 = sshll.u32 %s7, 4
      %s296 = int_to_ptr.hbm [resolvable:$true] %s295
      %301 = dma.vmem_to_hbm [thread:$0]  %s294, 256, %s296, [#allocation3], 128, 128, 8
    $region33: #{_dense_decoder_impl.1} parent=1 // pred_fallthru
      _
    // Predicated region
    $region34: #{_dense_decoder_impl.1} parent=1 // pred_check
      _
    $region35: #{_dense_decoder_impl.1} parent=1 // pred_check_branch
      %303 = sbr.rel (0) target = $region37
    $region36: #{_dense_decoder_impl.1} parent=1 // pred_region
      %305 = dma.done [#allocation3], 256
    $region37: #{_dense_decoder_impl.1} parent=1 // pred_fallthru
      _
    %306 = vsyncpa [#allocation3], 1

// kernel: _dense_decoder_impl.1
$region0: #{_dense_decoder_impl.1}
  #allocation0 [shape = 'u32[]', space=smem, size = 0x4, offset = 0x4, fixed_abs, tag = 'smem constant byte address 0x4 - core index']
  #allocation1 [shape = 'u32[72,128]{1,0:T(1,128)}', space=vmem, size = 0x9000, scoped, tag = 'internal scratch']
  %s0 = inlined_call_operand.vmem [shape: bf16[16,128], index: 0, kind: input, shape index: {}]
  %s1 = inlined_call_operand.vmem [shape: bf16[128,128], index: 1, kind: input, shape index: {}]
  %s2 = inlined_call_operand.vmem [shape: f32[1,128], index: 2, kind: input, shape index: {}]
  %s3 = inlined_call_operand.vmem [shape: bf16[128,128], index: 3, kind: input, shape index: {}]
  %s4 = inlined_call_operand.vmem [shape: f32[1,128], index: 4, kind: input, shape index: {}]
  %s5 = inlined_call_operand.vmem [shape: bf16[128,128], index: 5, kind: input, shape index: {}]
  %s6 = inlined_call_operand.vmem [shape: f32[1,128], index: 6, kind: input, shape index: {}]
  %s7 = inlined_call_operand.hbm [shape: f32[16,128], index: 7, kind: output, shape index: {}]
  %s8 = sld [smem:[#allocation0]]
  $region38: #{_dense_decoder_impl.1} parent=0
    _
  %s10 = ssub.s32 1, %s8
  %s11 = scalar_select 0, %s10, %s8
  $region1: #{_dense_decoder_impl.1} parent=0
    #allocation2 [shape = 'u8[8192]{0}', space=vmem, size = 0x2000, scoped, tag = 'output window, operand 0, single buffered']
    #allocation3 [shape = 's32[1]{0}', space=sflag, size = 0x4, scoped, tag = 'scoped memory for _dense_decoder_impl.1']
    %12 = vsyncpa [#allocation3], 0
    // Predicated region
    $region2: #{_dense_decoder_impl.1} parent=1 // pred_check
      _
    $region3: #{_dense_decoder_impl.1} parent=1 // pred_check_branch
      %14 = sbr.rel (0) target = $region5
    $region4: #{_dense_decoder_impl.1} parent=1 // pred_region
      _
    $region5: #{_dense_decoder_impl.1} parent=1 // pred_fallthru
      _
    // Predicated region
    $region6: #{_dense_decoder_impl.1} parent=1 // pred_check
      _
    $region7: #{_dense_decoder_impl.1} parent=1 // pred_check_branch
      %16 = sbr.rel (0) target = $region9
    $region8: #{_dense_decoder_impl.1} parent=1 // pred_region
      _
    $region9: #{_dense_decoder_impl.1} parent=1 // pred_fallthru
      _
    // Predicated region
    $region10: #{_dense_decoder_impl.1} parent=1 // pred_check
      _
    $region11: #{_dense_decoder_impl.1} parent=1 // pred_check_branch
      %18 = sbr.rel (0) target = $region13
    $region12: #{_dense_decoder_impl.1} parent=1 // pred_region
      _
    $region13: #{_dense_decoder_impl.1} parent=1 // pred_fallthru
      _
    // Predicated region
    $region14: #{_dense_decoder_impl.1} parent=1 // pred_check
      _
    $region15: #{_dense_decoder_impl.1} parent=1 // pred_check_branch
      %20 = sbr.rel (0) target = $region17
    $region16: #{_dense_decoder_impl.1} parent=1 // pred_region
      _
    $region17: #{_dense_decoder_impl.1} parent=1 // pred_fallthru
      _
    // Predicated region
    $region18: #{_dense_decoder_impl.1} parent=1 // pred_check
      _
    $region19: #{_dense_decoder_impl.1} parent=1 // pred_check_branch
      %22 = sbr.rel (0) target = $region21
    $region20: #{_dense_decoder_impl.1} parent=1 // pred_region
      _
    $region21: #{_dense_decoder_impl.1} parent=1 // pred_fallthru
      _
    // Predicated region
    $region22: #{_dense_decoder_impl.1} parent=1 // pred_check
      _
    $region23: #{_dense_decoder_impl.1} parent=1 // pred_check_branch
      %24 = sbr.rel (0) target = $region25
    $region24: #{_dense_decoder_impl.1} parent=1 // pred_region
      _
    $region25: #{_dense_decoder_impl.1} parent=1 // pred_fallthru
      _
    // Predicated region
    $region26: #{_dense_decoder_impl.1} parent=1 // pred_check
      _
    $region27: #{_dense_decoder_impl.1} parent=1 // pred_check_branch
      %26 = sbr.rel (0) target = $region29
    $region28: #{_dense_decoder_impl.1} parent=1 // pred_region
      _
    $region29: #{_dense_decoder_impl.1} parent=1 // pred_fallthru
      _
    %v27 = vld [vmem:[%s0] sm:$0xf]
    %v28 = vld [vmem:[%s0 + $0x4] sm:$0xf]
    %v29 = vld [vmem:[%s1] sm:$0xf]
    %v30 = vld [vmem:[%s1 + $0x4] sm:$0xf]
    %v31 = vld [vmem:[%s1 + $0x8] sm:$0xf]
    %v32 = vld [vmem:[%s1 + $0xc] sm:$0xf]
    %v33 = vld [vmem:[%s1 + $0x10] sm:$0xf]
    %v34 = vld [vmem:[%s1 + $0x14] sm:$0xf]
    %v35 = vld [vmem:[%s1 + $0x18] sm:$0xf]
    %v36 = vld [vmem:[%s1 + $0x1c] sm:$0xf]
    %v37 = vld [vmem:[%s1 + $0x20] sm:$0xf]
    %v38 = vld [vmem:[%s1 + $0x24] sm:$0xf]
    %v39 = vld [vmem:[%s1 + $0x28] sm:$0xf]
    %v40 = vld [vmem:[%s1 + $0x2c] sm:$0xf]
    %v41 = vld [vmem:[%s1 + $0x30] sm:$0xf]
    %v42 = vld [vmem:[%s1 + $0x34] sm:$0xf]
    %v43 = vld [vmem:[%s1 + $0x38] sm:$0xf]
    %v44 = vld [vmem:[%s1 + $0x3c] sm:$0xf]
    %v45 = vld [vmem:[%s2] sm:$0x1]
    %v47 = vperm.slane %v45, 0
    %v51 = vunpack.c.l.b16 %v27
    %v52 = vunpack.c.l.b16 %v28
    %v53 = vpack.c.b16 %v52, %v51
    %v71 = vunpack.c.l.b16 %v29
    %v72 = vunpack.c.l.b16 %v30
    %v73 = vunpack.c.l.b16 %v31
    %v74 = vunpack.c.l.b16 %v32
    %v75 = vunpack.c.l.b16 %v33
    %v76 = vunpack.c.l.b16 %v34
    %v77 = vunpack.c.l.b16 %v35
    %v78 = vunpack.c.l.b16 %v36
    %v79 = vunpack.c.l.b16 %v37
    %v80 = vunpack.c.l.b16 %v38
    %v81 = vunpack.c.l.b16 %v39
    %v82 = vunpack.c.l.b16 %v40
    %v83 = vunpack.c.l.b16 %v41
    %v84 = vunpack.c.l.b16 %v42
    %v85 = vunpack.c.l.b16 %v43
    %v86 = vunpack.c.l.b16 %v44
    %v87 = vpack.c.b16 %v72, %v71
    %v88 = vpack.c.b16 %v74, %v73
    %v89 = vpack.c.b16 %v76, %v75
    %v90 = vpack.c.b16 %v78, %v77
    %v91 = vpack.c.b16 %v80, %v79
    %v92 = vpack.c.b16 %v82, %v81
    %v93 = vpack.c.b16 %v84, %v83
    %v94 = vpack.c.b16 %v86, %v85
    %103 = vmatpush.bf16.msra.mxu0 %v94
    %104 = vmatpush.bf16.msra.mxu0 %v93
    %105 = vmatpush.bf16.msra.mxu0 %v92
    %106 = vmatpush.bf16.msra.mxu0 %v91
    %107 = vmatpush.bf16.msra.mxu0 %v90
    %108 = vmatpush.bf16.msra.mxu0 %v89
    %109 = vmatpush.bf16.msra.mxu0 %v88
    %110 = vmatpush.bf16.msra.mxu0 %v87
    %111 = vmatmul.bf16.gmra.mxu0 %v53
    %v112 = vpop.f32.mrf.mxu0
    %v113 = vadd.f32 %v47, %v112
    %v114 = vpop.f32.mrf.mxu0
    %v115 = vadd.f32 %v47, %v114
    %116 = vdwg.mxu0
    %v117 = vmax.f32 %v113, 0.0
    %v118 = vmax.f32 %v115, 0.0
    %v119 = vpack.c.bf16 %v118, %v117
    %v120 = vld [vmem:[%s3] sm:$0xf]
    %v121 = vld [vmem:[%s3 + $0x4] sm:$0xf]
    %v122 = vld [vmem:[%s3 + $0x8] sm:$0xf]
    %v123 = vld [vmem:[%s3 + $0xc] sm:$0xf]
    %v124 = vld [vmem:[%s3 + $0x10] sm:$0xf]
    %v125 = vld [vmem:[%s3 + $0x14] sm:$0xf]
    %v126 = vld [vmem:[%s3 + $0x18] sm:$0xf]
    %v127 = vld [vmem:[%s3 + $0x1c] sm:$0xf]
    %v128 = vld [vmem:[%s3 + $0x20] sm:$0xf]
    %v129 = vld [vmem:[%s3 + $0x24] sm:$0xf]
    %v130 = vld [vmem:[%s3 + $0x28] sm:$0xf]
    %v131 = vld [vmem:[%s3 + $0x2c] sm:$0xf]
    %v132 = vld [vmem:[%s3 + $0x30] sm:$0xf]
    %v133 = vld [vmem:[%s3 + $0x34] sm:$0xf]
    %v134 = vld [vmem:[%s3 + $0x38] sm:$0xf]
    %v135 = vld [vmem:[%s3 + $0x3c] sm:$0xf]
    %v136 = vld [vmem:[%s4] sm:$0x1]
    %v138 = vperm.slane %v136, 0
    %v156 = vunpack.c.l.b16 %v120
    %v157 = vunpack.c.l.b16 %v121
    %v158 = vunpack.c.l.b16 %v122
    %v159 = vunpack.c.l.b16 %v123
    %v160 = vunpack.c.l.b16 %v124
    %v161 = vunpack.c.l.b16 %v125
    %v162 = vunpack.c.l.b16 %v126
    %v163 = vunpack.c.l.b16 %v127
    %v164 = vunpack.c.l.b16 %v128
    %v165 = vunpack.c.l.b16 %v129
    %v166 = vunpack.c.l.b16 %v130
    %v167 = vunpack.c.l.b16 %v131
    %v168 = vunpack.c.l.b16 %v132
    %v169 = vunpack.c.l.b16 %v133
    %v170 = vunpack.c.l.b16 %v134
    %v171 = vunpack.c.l.b16 %v135
    %v172 = vpack.c.b16 %v157, %v156
    %v173 = vpack.c.b16 %v159, %v158
    %v174 = vpack.c.b16 %v161, %v160
    %v175 = vpack.c.b16 %v163, %v162
    %v176 = vpack.c.b16 %v165, %v164
    %v177 = vpack.c.b16 %v167, %v166
    %v178 = vpack.c.b16 %v169, %v168
    %v179 = vpack.c.b16 %v171, %v170
    %188 = vmatpush.bf16.msra.mxu0 %v179
    %189 = vmatpush.bf16.msra.mxu0 %v178
    %190 = vmatpush.bf16.msra.mxu0 %v177
    %191 = vmatpush.bf16.msra.mxu0 %v176
    %192 = vmatpush.bf16.msra.mxu0 %v175
    %193 = vmatpush.bf16.msra.mxu0 %v174
    %194 = vmatpush.bf16.msra.mxu0 %v173
    %195 = vmatpush.bf16.msra.mxu0 %v172
    %196 = vmatmul.bf16.gmra.mxu0 %v119
    %v197 = vpop.f32.mrf.mxu0
    %v198 = vadd.f32 %v138, %v197
    %v199 = vpop.f32.mrf.mxu0
    %v200 = vadd.f32 %v138, %v199
    %201 = vdwg.mxu0
    %v202 = vmax.f32 %v198, 0.0
    %v203 = vmax.f32 %v200, 0.0
    %v204 = vpack.c.bf16 %v203, %v202
    %v205 = vld [vmem:[%s5] sm:$0xf]
    %v206 = vld [vmem:[%s5 + $0x4] sm:$0xf]
    %v207 = vld [vmem:[%s5 + $0x8] sm:$0xf]
    %v208 = vld [vmem:[%s5 + $0xc] sm:$0xf]
    %v209 = vld [vmem:[%s5 + $0x10] sm:$0xf]
    %v210 = vld [vmem:[%s5 + $0x14] sm:$0xf]
    %v211 = vld [vmem:[%s5 + $0x18] sm:$0xf]
    %v212 = vld [vmem:[%s5 + $0x1c] sm:$0xf]
    %v213 = vld [vmem:[%s5 + $0x20] sm:$0xf]
    %v214 = vld [vmem:[%s5 + $0x24] sm:$0xf]
    %v215 = vld [vmem:[%s5 + $0x28] sm:$0xf]
    %v216 = vld [vmem:[%s5 + $0x2c] sm:$0xf]
    %v217 = vld [vmem:[%s5 + $0x30] sm:$0xf]
    %v218 = vld [vmem:[%s5 + $0x34] sm:$0xf]
    %v219 = vld [vmem:[%s5 + $0x38] sm:$0xf]
    %v220 = vld [vmem:[%s5 + $0x3c] sm:$0xf]
    %v221 = vld [vmem:[%s6] sm:$0x1]
    %v223 = vperm.slane %v221, 0
    %v241 = vunpack.c.l.b16 %v205
    %v242 = vunpack.c.l.b16 %v206
    %v243 = vunpack.c.l.b16 %v207
    %v244 = vunpack.c.l.b16 %v208
    %v245 = vunpack.c.l.b16 %v209
    %v246 = vunpack.c.l.b16 %v210
    %v247 = vunpack.c.l.b16 %v211
    %v248 = vunpack.c.l.b16 %v212
    %v249 = vunpack.c.l.b16 %v213
    %v250 = vunpack.c.l.b16 %v214
    %v251 = vunpack.c.l.b16 %v215
    %v252 = vunpack.c.l.b16 %v216
    %v253 = vunpack.c.l.b16 %v217
    %v254 = vunpack.c.l.b16 %v218
    %v255 = vunpack.c.l.b16 %v219
    %v256 = vunpack.c.l.b16 %v220
    %v257 = vpack.c.b16 %v242, %v241
    %v258 = vpack.c.b16 %v244, %v243
    %v259 = vpack.c.b16 %v246, %v245
    %v260 = vpack.c.b16 %v248, %v247
    %v261 = vpack.c.b16 %v250, %v249
    %v262 = vpack.c.b16 %v252, %v251
    %v263 = vpack.c.b16 %v254, %v253
    %v264 = vpack.c.b16 %v256, %v255
    %273 = vmatpush.bf16.msra.mxu0 %v264
    %274 = vmatpush.bf16.msra.mxu0 %v263
    %275 = vmatpush.bf16.msra.mxu0 %v262
    %276 = vmatpush.bf16.msra.mxu0 %v261
    %277 = vmatpush.bf16.msra.mxu0 %v260
    %278 = vmatpush.bf16.msra.mxu0 %v259
    %279 = vmatpush.bf16.msra.mxu0 %v258
    %280 = vmatpush.bf16.msra.mxu0 %v257
    %281 = vmatmul.bf16.gmra.mxu0 %v204
    %v282 = vpop.f32.mrf.mxu0
    %v283 = vadd.f32 %v223, %v282
    %v284 = vpop.f32.mrf.mxu0
    %v285 = vadd.f32 %v223, %v284
    %286 = vdwg.mxu0
    %287 = vst [vmem:[#allocation2] sm:$0xff] %v283
    %288 = vst [vmem:[#allocation2 + $0x8] sm:$0xff] %v285
    // Predicated region
    $region30: #{_dense_decoder_impl.1} parent=1 // pred_check
      _
    $region31: #{_dense_decoder_impl.1} parent=1 // pred_check_branch
      %290 = sbr.rel (0) target = $region33
    $region32: #{_dense_decoder_impl.1} parent=1 // pred_region
      %292 = vsyncadd [#allocation3], 0
      %s293 = sshll.u32 [#allocation2], 4
      %s294 = int_to_ptr.vmem [resolvable:$true] %s293
      %s295 = sshll.u32 %s7, 4
      %s296 = int_to_ptr.hbm [resolvable:$true] %s295
      %301 = dma.vmem_to_hbm [thread:$0]  %s294, 256, %s296, [#allocation3], 128, 128, 8
    $region33: #{_dense_decoder_impl.1} parent=1 // pred_fallthru
      _
    // Predicated region
    $region34: #{_dense_decoder_impl.1} parent=1 // pred_check
      _
    $region35: #{_dense_decoder_impl.1} parent=1 // pred_check_branch
      %303 = sbr.rel (0) target = $region37
    $region36: #{_dense_decoder_impl.1} parent=1 // pred_region
      %305 = dma.done [#allocation3], 256
    $region37: #{_dense_decoder_impl.1} parent=1 // pred_fallthru
      _
    %306 = vsyncpa [#allocation3], 1

</llo_original>
